<compile_context>
chip_gen: v7x
topology: tpu7x:2x2x1
jax: 0.10.0
libtpu: 0.0.40
codegen_flags: <defaults>
</compile_context>

<pallas_src>
import jax
import jax.numpy as jnp
from jax.experimental import pallas as pl
from jax.experimental.pallas import tpu as pltpu


def cxam_kernel(x_ref, w_ref, b_ref, o_ref):
    # x_ref block: (1, C, TN) in x's native dtype for one (batch, N-tile) grid point.
    c = o_ref.shape[1]
    x = x_ref[0]                                       # (C, TN)
    xb = x.astype(jnp.bfloat16)                        # in-kernel cast (VPU), no HBM pass

    # One MXU push: rows 0..C-1 = value projection, row C = attention logits.
    acc = jnp.dot(w_ref[0], xb, preferred_element_type=jnp.float32) + b_ref[0]  # (C+1, TN) f32

    attn = jax.nn.sigmoid(acc[c:])                     # (1, TN) f32 (EUP)
    o_ref[0] = (acc[:c] * attn).astype(o_ref.dtype)    # (C, TN), lane-dense store


def _round_up(v, m):
    return ((v + m - 1) // m) * m


def _pick_tn(n, c, in_bytes, out_bytes, batch, budget_bytes):
    """Largest 128-multiple N-tile whose double-buffered blocks fit `budget_bytes`,
    while keeping >=2 N-tiles per batch when the batch axis alone can't feed 2 TCs."""
    n128 = _round_up(n, 128)
    per_col = 2 * c * (in_bytes + out_bytes)           # x + out blocks, double-buffered
    max_tn = max((budget_bytes // (per_col * 128)) * 128, 128)
    tiles_per_batch = 1 if batch >= 4 else 2           # keep both v7x TCs fed at small B
    target = _round_up(-(-n128 // tiles_per_batch), 128)
    return min(max_tn, target, n128)


def cxam_forward(x_nchw, wq, bq, wk, bk, wv, bv, *,
                 out_dtype=None, vmem_budget_bytes=16 << 20):
    """x_nchw: (B, C, H, W).  Weights are (C_in, C_out); biases (1, C_out).

    `out_dtype` defaults to x's dtype (module semantics); pass jnp.bfloat16 to halve
    the output HBM traffic when the downstream consumer allows it.
    """
    B, C, H, W = x_nchw.shape
    N = H * W
    out_dtype = x_nchw.dtype if out_dtype is None else out_dtype
    in_bytes = jnp.dtype(x_nchw.dtype).itemsize
    out_bytes = jnp.dtype(out_dtype).itemsize

    # Channel-major flatten: NCHW -> (B, C, N).  Pure reshape, no HBM transpose.
    x = x_nchw.reshape(B, C, N)

    # ---- tiny per-batch precompute (plain JAX, exact algebra, O(B*C)) -------
    #   logits_p = x_p . (Wq @ k_mean) + bq . k_mean,  k_mean = x_mean @ Wk + bk
    # (mean over the FULL, unpadded spatial extent)
    x_mean = jnp.mean(x.astype(jnp.float32), axis=2)               # (B, C)
    k_mean = x_mean @ wk + bk                                       # (B, Cr)
    w_attn = k_mean @ wq.T                                          # (B, C)
    b_attn = jnp.sum(k_mean * bq, axis=1)                           # (B,)

    # ---- fold attention row into the value weight / bias --------------------
    # Combined weight (B, C+1, C): rows 0..C-1 = Wv^T, row C = w_attn[b].
    wvt = jnp.broadcast_to(wv.T[None].astype(jnp.bfloat16), (B, C, C))
    w_comb = jnp.concatenate(
        [wvt, w_attn[:, None, :].astype(jnp.bfloat16)], axis=1)     # (B, C+1, C) bf16
    bv_col = jnp.broadcast_to(bv.reshape(1, C, 1).astype(jnp.float32), (B, C, 1))
    b_comb = jnp.concatenate(
        [bv_col, b_attn.reshape(B, 1, 1).astype(jnp.float32)], axis=1)  # (B, C+1, 1) f32

    # ---- tiling / grid -------------------------------------------------------
    tn = _pick_tn(N, C, in_bytes, out_bytes, B, vmem_budget_bytes)
    n_pad = _round_up(N, tn)
    if n_pad != N:
        # Pad N to a TN multiple (edge outputs sliced off below) instead of using a
        # full-extent block that could exceed VMEM on large odd spatial sizes.
        x = jnp.pad(x, ((0, 0), (0, 0), (0, n_pad - N)))
    grid = (B, n_pad // tn)

    # VMEM limit from the actual tile formula (double-buffered x + out + weights)
    # plus compiler-internal slack; stays well under v7x's 64 MiB.
    w_rows = C + 1
    work_bytes = 2 * (C * tn * in_bytes + C * tn * out_bytes + w_rows * C * 2 + w_rows * 4)
    vmem_limit = int(min(work_bytes + (8 << 20), 48 << 20))

    per_batch = lambda b, n: (b, 0, 0)

    out_flat = pl.pallas_call(
        cxam_kernel,
        out_shape=jax.ShapeDtypeStruct((B, C, n_pad), out_dtype),
        grid_spec=pl.GridSpec(
            grid=grid,
            in_specs=[
                pl.BlockSpec((1, C, tn), lambda b, n: (b, 0, n)),   # x tile (native dtype)
                pl.BlockSpec((1, C + 1, C), per_batch),             # combined weight
                pl.BlockSpec((1, C + 1, 1), per_batch),             # combined bias column
            ],
            out_specs=pl.BlockSpec((1, C, tn), lambda b, n: (b, 0, n)),
        ),
        compiler_params=pltpu.CompilerParams(
            dimension_semantics=("parallel", "parallel"),
            vmem_limit_bytes=vmem_limit,
        ),
    )(x, w_comb, b_comb)

    if n_pad != N:
        out_flat = out_flat[:, :, :N]
    return out_flat.reshape(B, C, H, W)


def cxam_reference(x_nchw, wq, bq, wk, bk, wv, bv):
    """Plain-JAX f32 reference that mirrors the PyTorch code literally."""
    B, C, H, W = x_nchw.shape
    N = H * W
    xf = x_nchw.reshape(B, C, N)                                    # (B, C, N)
    q = jnp.einsum('bcn,cr->brn', xf, wq) + bq.reshape(1, -1, 1)    # (B, Cr, N)
    k = jnp.einsum('bcn,cr->brn', xf, wk) + bk.reshape(1, -1, 1)    # (B, Cr, N)
    v = jnp.einsum('bcn,co->bon', xf, wv) + bv.reshape(1, -1, 1)    # (B, C, N)
    R = jnp.einsum('brp,brn->bpn', q, k)                            # (B, N, N)
    attn = jax.nn.sigmoid(jnp.mean(R, axis=2))                      # (B, N)
    out = v * attn[:, None, :]                                      # (B, C, N)
    return out.reshape(B, C, H, W)


if __name__ == "__main__":
    # Shapes consistent with the module: reduction=8 => Cr = out_channels // 8.
    B, C, H, W = 2, 32, 32, 32          # N = 1024 -> TN = 512, grid = (2, 2)
    out_channels, reduction = 32, 8
    Cr = out_channels // reduction

    key = jax.random.PRNGKey(0)
    kx, kx2, kq, kbq, kk, kbk, kv, kbv = jax.random.split(key, 8)

    x = jax.random.normal(kx, (B, C, H, W), dtype=jnp.float32)

    # Conv2d 1x1 parameters stored as (C_in, C_out) weights, (1, C_out) biases.
    wq = jax.random.normal(kq, (C, Cr), dtype=jnp.float32) * 0.1
    bq = jax.random.normal(kbq, (1, Cr), dtype=jnp.float32) * 0.1
    wk = jax.random.normal(kk, (C, Cr), dtype=jnp.float32) * 0.1
    bk = jax.random.normal(kbk, (1, Cr), dtype=jnp.float32) * 0.1
    wv = jax.random.normal(kv, (C, C), dtype=jnp.float32) * 0.1
    bv = jax.random.normal(kbv, (1, C), dtype=jnp.float32) * 0.1

    # --- default path: module-preserving f32 output, x read once in f32 ------
    out = cxam_forward(x, wq, bq, wk, bk, wv, bv)
    out = jax.block_until_ready(out)
    ref = cxam_reference(x, wq, bq, wk, bk, wv, bv)
    assert out.shape == (B, C, H, W)
    # bf16 MXU inputs with f32 accumulation -> loosened tolerance vs f32 reference.
    assert jnp.allclose(out, ref, atol=2e-2, rtol=2e-2), "mismatch vs reference"

    # --- padded-N path (N = 400 not a 128 multiple) + bf16 output option -----
    H2 = W2 = 20
    x2 = jax.random.normal(kx2, (B, C, H2, W2), dtype=jnp.float32)
    out2 = cxam_forward(x2, wq, bq, wk, bk, wv, bv, out_dtype=jnp.bfloat16)
    out2 = jax.block_until_ready(out2)
    ref2 = cxam_reference(x2, wq, bq, wk, bk, wv, bv)
    assert out2.shape == (B, C, H2, W2)
    assert jnp.allclose(out2.astype(jnp.float32), ref2, atol=3e-2, rtol=3e-2), \
        "mismatch vs reference (padded/bf16 path)"

    print("KERNEL_OK")
</pallas_src>

<mosaic_0001>
module attributes {stable_mosaic.version = 11 : i64} {
  func.func @cxam_kernel(%arg0: i32, %arg1: i32, %arg2: memref<1x32x512xf32, #tpu.memory_space<vmem>>, %arg3: memref<1x33x32xbf16, #tpu.memory_space<vmem>>, %arg4: memref<1x33x1xf32, #tpu.memory_space<vmem>>, %arg5: memref<1x32x512xf32, #tpu.memory_space<vmem>>) attributes {dimension_semantics = [#tpu.dimension_semantics<parallel>, #tpu.dimension_semantics<parallel>], iteration_bounds = array<i64: 2, 2>, scalar_prefetch = 0 : i64, scratch_operands = 0 : i64, tpu.core_type = #tpu.core_type<tc>, window_params = [{transform_indices = @transform_0, window_bounds = array<i64: 1, 32, 512>}, {transform_indices = @transform_1, window_bounds = array<i64: 1, 33, 32>}, {transform_indices = @transform_2, window_bounds = array<i64: 1, 33, 1>}, {transform_indices = @transform_3, window_bounds = array<i64: 1, 32, 512>}]} {
    %c0 = arith.constant 0 : index
    %c0_0 = arith.constant 0 : index
    %c0_1 = arith.constant 0 : index
    %0 = vector.load %arg2[%c0, %c0_0, %c0_1] : memref<1x32x512xf32, #tpu.memory_space<vmem>>, vector<1x32x512xf32>
    %1 = vector.shape_cast %0 : vector<1x32x512xf32> to vector<32x512xf32>
    %2 = arith.truncf %1 : vector<32x512xf32> to vector<32x512xbf16>
    %c0_2 = arith.constant 0 : index
    %c0_3 = arith.constant 0 : index
    %c0_4 = arith.constant 0 : index
    %3 = vector.load %arg3[%c0_2, %c0_3, %c0_4] : memref<1x33x32xbf16, #tpu.memory_space<vmem>>, vector<1x33x32xbf16>
    %4 = vector.shape_cast %3 : vector<1x33x32xbf16> to vector<33x32xbf16>
    %cst = arith.constant dense<0.000000e+00> : vector<33x512xf32>
    %5 = tpu.matmul %4, %2, %cst {dimension_numbers = #tpu.dot_dimension_numbers<[1], [0], [0], [1], [0, 0, 1, 1], [], []>} : vector<33x32xbf16>, vector<32x512xbf16>, vector<33x512xf32> -> vector<33x512xf32>
    %c0_5 = arith.constant 0 : index
    %c0_6 = arith.constant 0 : index
    %c0_7 = arith.constant 0 : index
    %6 = vector.load %arg4[%c0_5, %c0_6, %c0_7] : memref<1x33x1xf32, #tpu.memory_space<vmem>>, vector<1x33x1xf32>
    %7 = vector.shape_cast %6 : vector<1x33x1xf32> to vector<33x1xf32>
    %8 = vector.broadcast %7 : vector<33x1xf32> to vector<33x512xf32>
    %9 = arith.addf %5, %8 : vector<33x512xf32>
    %10 = vector.extract_strided_slice %9 {offsets = [32, 0], sizes = [1, 512], strides = [1, 1]} : vector<33x512xf32> to vector<1x512xf32>
    %11 = arith.negf %10 : vector<1x512xf32>
    %12 = math.exp %11 : vector<1x512xf32>
    %cst_8 = arith.constant 1.000000e+00 : f32
    %13 = vector.broadcast %cst_8 : f32 to vector<1x512xf32>
    %14 = arith.addf %13, %12 : vector<1x512xf32>
    %15 = arith.divf %13, %14 : vector<1x512xf32>
    %16 = vector.extract_strided_slice %9 {offsets = [0, 0], sizes = [32, 512], strides = [1, 1]} : vector<33x512xf32> to vector<32x512xf32>
    %17 = vector.broadcast %15 : vector<1x512xf32> to vector<32x512xf32>
    %18 = arith.mulf %16, %17 : vector<32x512xf32>
    %c0_9 = arith.constant 0 : index
    %c0_10 = arith.constant 0 : index
    %c0_11 = arith.constant 0 : index
    %19 = vector.load %arg5[%c0_9, %c0_10, %c0_11] : memref<1x32x512xf32, #tpu.memory_space<vmem>>, vector<1x32x512xf32>
    %20 = vector.shape_cast %19 : vector<1x32x512xf32> to vector<32x512xf32>
    %21 = vector.shape_cast %18 : vector<32x512xf32> to vector<1x32x512xf32>
    tpu.vector_store %arg5[%c0_9, %c0_10, %c0_11], %21 {strides = array<i32>} : memref<1x32x512xf32, #tpu.memory_space<vmem>>, vector<1x32x512xf32>,
    return
  }
  func.func @transform_0(%arg0: i32, %arg1: i32) -> (i32, i32, i32) {
    %c0_i32 = arith.constant 0 : i32
    %c0_i32_0 = arith.constant 0 : i32
    return %arg0, %c0_i32, %arg1 : i32, i32, i32
  }
  func.func @transform_1(%arg0: i32, %arg1: i32) -> (i32, i32, i32) {
    %c0_i32 = arith.constant 0 : i32
    %c0_i32_0 = arith.constant 0 : i32
    %c0_i32_1 = arith.constant 0 : i32
    return %arg0, %c0_i32, %c0_i32_0 : i32, i32, i32
  }
  func.func @transform_2(%arg0: i32, %arg1: i32) -> (i32, i32, i32) {
    %c0_i32 = arith.constant 0 : i32
    %c0_i32_0 = arith.constant 0 : i32
    %c0_i32_1 = arith.constant 0 : i32
    return %arg0, %c0_i32, %c0_i32_0 : i32, i32, i32
  }
  func.func @transform_3(%arg0: i32, %arg1: i32) -> (i32, i32, i32) {
    %c0_i32 = arith.constant 0 : i32
    %c0_i32_0 = arith.constant 0 : i32
    return %arg0, %c0_i32, %arg1 : i32, i32, i32
  }
}

</mosaic_0001>

<llo_original>
// kernel: tpu_custom_call.1
$region0: #{tpu_custom_call.1}
  #allocation0 [shape = 'u32[]', space=smem, size = 0x4, offset = 0x4, fixed_abs, tag = 'smem constant byte address 0x4 - core index']
  #allocation1 [shape = 'u32[144,128]{1,0:T(1,128)}', space=vmem, size = 0x12000, scoped, tag = 'internal scratch']
  %s0 = inlined_call_operand.hbm [shape: f32[2,32,1024], index: 0, kind: input, shape index: {}]
  %s1 = inlined_call_operand.vmem [shape: bf16[2,33,32], index: 1, kind: input, shape index: {}]
  %s2 = inlined_call_operand.vmem [shape: f32[2,33,1], index: 2, kind: input, shape index: {}]
  %s3 = inlined_call_operand.hbm [shape: f32[2,32,1024], index: 3, kind: output, shape index: {}]
  %s4 = sld [smem:[#allocation0]]
  $region49: #{tpu_custom_call.1} parent=0
    _
  %s6 = ssub.s32 1, %s4
  %s7 = scalar_select 0, %s6, %s4
  $region1: #{tpu_custom_call.1} parent=0
    #allocation2 [shape = 'u8[131072]{0}', space=vmem, size = 0x20000, scoped, tag = 'input window, operand 0']
    #allocation3 [shape = 's32[2]{0}', space=sflag, size = 0x8, scoped, tag = 'scoped memory for tpu_custom_call.1']
    #allocation4 [shape = 's32[2]{0}', space=sflag, size = 0x8, scoped, tag = 'scoped memory for tpu_custom_call.1']
    #allocation5 [shape = 'u8[131072]{0}', space=vmem, size = 0x20000, scoped, tag = 'output window, operand 0']
    %8 = vsyncpa [#allocation3], 0
    %s9 = scalar_lea.sflag [#allocation3], 1
    %10 = vsyncpa %s9, 0
    %11 = vsyncpa [#allocation4], 0
    %s12 = scalar_lea.sflag [#allocation4], 1
    %13 = vsyncpa %s12, 0
    loop: start=0, step=1, limit=6
    $region2: #{tpu_custom_call.1} parent=1 // loop_pre_header
      _
    $region3: #{tpu_custom_call.1} parent=1 // loop_header
      %s15 = sphi 0, %s19
      %p16 = scmp.ge.s32.totalorder %s15, 6
      %s22 = sphi 0, %s34
      %s23 = sphi 0, %s30
      %s24 = sphi 0, %s22
      %s25 = sphi 0, %s23
      %s26 = sphi 0, %s24
      %s27 = sphi 0, %s25
      %s39 = sphi 0, %s41
      %s42 = sphi 0, %s39
      %s43 = sphi 0, %s42
      %s59 = sphi 0, %s43
      %s65 = sphi 0, %s67
      %s68 = sphi 0, %s65
      %s69 = sphi 0, %s68
      %s85 = sphi 0, %s69
      %s91 = sphi 0, %s93
      %s94 = sphi 0, %s91
      %s95 = sphi 0, %s94
      %s111 = sphi 0, %s95
      %s119 = sphi 0, %s121
      %s122 = sphi 0, %s119
      %s123 = sphi 0, %s122
      %s139 = sphi 0, %s123
    $region4: #{tpu_custom_call.1} parent=1 // loop_header_branch
      %18 = sbr.rel (%p16) target = $region8
    $region5: #{tpu_custom_call.1} parent=1 // loop_body
      %s20 = ssub.s32 %s15, 1
      %s21 = ssub.s32 %s15, 2
      %s28 = sadd.s32 1, %s23
      %p29 = scmp.ge.s32.totalorder %s28, 2
      %s30 = scalar_select %p29, 0, %s28
      %s31 = sadd.s32 1, %s22
      %s32 = scalar_select %p29, %s31, %s22
      %p33 = scmp.ge.s32.totalorder %s32, 2
      %s34 = scalar_select %p33, 0, %s32
      %s35 = ssub.s32 %s22, %s34
      %s36 = ssub.s32 %s23, %s30
      %s37 = sor.u32 %s35, %s36
      %p38 = scmp.eq.s32.totalorder %s37, 0
      %s40 = sadd.s32 %s39, 1
      %s41 = scalar_select %p38, %s39, %s40
      %p44 = pneg %p38
      %p45 = scmp.eq.s32.totalorder %s15, 3
      %p46 = por %p44, %p45
      %p47 = scmp.ne.s32.totalorder %s39, %s42
      %p48 = scmp.eq.s32.totalorder %s15, 0
      %p49 = por %p47, %p48
      %p50 = scmp.ne.s32.totalorder %s39, %s42
      %p51 = scmp.eq.s32.totalorder %s20, 3
      %p52 = por %p50, %p51
      %p53 = scmp.ne.s32.totalorder %s42, %s43
      %p54 = scmp.eq.s32.totalorder %s20, 0
      %p55 = por %p53, %p54
      %p56 = scmp.ne.s32.totalorder %s42, %s43
      %p57 = scmp.eq.s32.totalorder %s21, 3
      %p58 = por %p56, %p57
      %p60 = scmp.ne.s32.totalorder %s43, %s59
      %p61 = scmp.eq.s32.totalorder %s21, 0
      %p62 = por %p60, %p61
      %s63 = ssub.s32 %s22, %s34
      %p64 = scmp.eq.s32.totalorder %s63, 0
      %s66 = sadd.s32 %s65, 1
      %s67 = scalar_select %p64, %s65, %s66
      %p70 = pneg %p64
      %p71 = scmp.eq.s32.totalorder %s15, 3
      %p72 = por %p70, %p71
      %p73 = scmp.ne.s32.totalorder %s65, %s68
      %p74 = scmp.eq.s32.totalorder %s15, 0
      %p75 = por %p73, %p74
      %p76 = scmp.ne.s32.totalorder %s65, %s68
      %p77 = scmp.eq.s32.totalorder %s20, 3
      %p78 = por %p76, %p77
      %p79 = scmp.ne.s32.totalorder %s68, %s69
      %p80 = scmp.eq.s32.totalorder %s20, 0
      %p81 = por %p79, %p80
      %p82 = scmp.ne.s32.totalorder %s68, %s69
      %p83 = scmp.eq.s32.totalorder %s21, 3
      %p84 = por %p82, %p83
      %p86 = scmp.ne.s32.totalorder %s69, %s85
      %p87 = scmp.eq.s32.totalorder %s21, 0
      %p88 = por %p86, %p87
      %s89 = ssub.s32 %s22, %s34
      %p90 = scmp.eq.s32.totalorder %s89, 0
      %s92 = sadd.s32 %s91, 1
      %s93 = scalar_select %p90, %s91, %s92
      %p96 = pneg %p90
      %p97 = scmp.eq.s32.totalorder %s15, 3
      %p98 = por %p96, %p97
      %p99 = scmp.ne.s32.totalorder %s91, %s94
      %p100 = scmp.eq.s32.totalorder %s15, 0
      %p101 = por %p99, %p100
      %p102 = scmp.ne.s32.totalorder %s91, %s94
      %p103 = scmp.eq.s32.totalorder %s20, 3
      %p104 = por %p102, %p103
      %p105 = scmp.ne.s32.totalorder %s94, %s95
      %p106 = scmp.eq.s32.totalorder %s20, 0
      %p107 = por %p105, %p106
      %p108 = scmp.ne.s32.totalorder %s94, %s95
      %p109 = scmp.eq.s32.totalorder %s21, 3
      %p110 = por %p108, %p109
      %p112 = scmp.ne.s32.totalorder %s95, %s111
      %p113 = scmp.eq.s32.totalorder %s21, 0
      %p114 = por %p112, %p113
      %s115 = ssub.s32 %s22, %s34
      %s116 = ssub.s32 %s23, %s30
      %s117 = sor.u32 %s115, %s116
      %p118 = scmp.eq.s32.totalorder %s117, 0
      %s120 = sadd.s32 %s119, 1
      %s121 = scalar_select %p118, %s119, %s120
      %p124 = pneg %p118
      %p125 = scmp.eq.s32.totalorder %s15, 3
      %p126 = por %p124, %p125
      %p127 = scmp.ne.s32.totalorder %s119, %s122
      %p128 = scmp.eq.s32.totalorder %s15, 0
      %p129 = por %p127, %p128
      %p130 = scmp.ne.s32.totalorder %s119, %s122
      %p131 = scmp.eq.s32.totalorder %s20, 3
      %p132 = por %p130, %p131
      %p133 = scmp.ne.s32.totalorder %s122, %s123
      %p134 = scmp.eq.s32.totalorder %s20, 0
      %p135 = por %p133, %p134
      %p136 = scmp.ne.s32.totalorder %s122, %s123
      %p137 = scmp.eq.s32.totalorder %s21, 3
      %p138 = por %p136, %p137
      %p140 = scmp.ne.s32.totalorder %s123, %s139
      %p141 = scmp.eq.s32.totalorder %s21, 0
      %p142 = por %p140, %p141
      %p143 = scmp.le.s32.totalorder 1, %s15
      %p144 = scmp.lt.s32.totalorder %s15, 5
      %p145 = pnand %p143, %p144
      %p146 = pneg %p145
      // Predicated region
      $region9: #{tpu_custom_call.1} parent=5 // pred_check
        _
      $region10: #{tpu_custom_call.1} parent=5 // pred_check_branch
        %148 = sbr.rel (%p145) target = $region12
      $region11: #{tpu_custom_call.1} parent=5 // pred_region
        %s149 = ssub.s32 %s15, 1
      $region12: #{tpu_custom_call.1} parent=5 // pred_fallthru
        _
      %p150 = scmp.lt.s32.totalorder %s15, 4
      // Predicated region
      $region13: #{tpu_custom_call.1} parent=5 // pred_check
        %p151 = pneg %p150
      $region14: #{tpu_custom_call.1} parent=5 // pred_check_branch
        %153 = sbr.rel (%p151) target = $region16
      $region15: #{tpu_custom_call.1} parent=5 // pred_region
        // Predicated region
        $region17: #{tpu_custom_call.1} parent=15 // pred_check
          %p154 = pneg %p49
        $region18: #{tpu_custom_call.1} parent=15 // pred_check_branch
          %156 = sbr.rel (%p154) target = $region20
        $region19: #{tpu_custom_call.1} parent=15 // pred_region
          %s157 = sand.u32 %s39, 1
          %s158 = scalar_lea.sflag [#allocation3], %s157
          %s159 = sand.u32 %s39, 1
          %s160 = smul.addr %s159, 128
          %s161 = scalar_lea.vmem [#allocation2], %s160
          %s162 = smul.u32 4, %s23
          %s164 = ssub.s32 2048, 2048
          %165 = vsyncadd %s158, %s164
          %s166 = smul.addr %s22, 32
          %s167 = sadd.s32 %s162, %s166
          %s168 = smul.addr %s167, 128
          %s169 = scalar_lea.hbm %s0, %s168
          %s170 = sshll.u32 %s161, 4
          %s171 = int_to_ptr.vmem [resolvable:$true] %s170
          %176 = dma.hbm_to_vmem [thread:$0]  %s169, 2048, %s171, %s158, 1024, 512, 32
        $region20: #{tpu_custom_call.1} parent=15 // pred_fallthru
          _
        // Predicated region
        $region21: #{tpu_custom_call.1} parent=15 // pred_check
          %p177 = pneg %p75
        $region22: #{tpu_custom_call.1} parent=15 // pred_check_branch
          %179 = sbr.rel (%p177) target = $region24
        $region23: #{tpu_custom_call.1} parent=15 // pred_region
          %p180 = scmp.lt.s32.totalorder %s22, 1
          %s181 = scalar_select %p180, %s22, 1
          %s182 = smul.addr %s181, 5
          %s183 = smul.addr %s182, 4
          %s184 = scalar_lea.vmem %s1, %s183
        $region24: #{tpu_custom_call.1} parent=15 // pred_fallthru
          _
        // Predicated region
        $region25: #{tpu_custom_call.1} parent=15 // pred_check
          %p185 = pneg %p101
        $region26: #{tpu_custom_call.1} parent=15 // pred_check_branch
          %187 = sbr.rel (%p185) target = $region28
        $region27: #{tpu_custom_call.1} parent=15 // pred_region
          %p188 = scmp.lt.s32.totalorder %s22, 1
          %s189 = scalar_select %p188, %s22, 1
          %s190 = smul.addr %s189, 5
          %s191 = smul.addr %s190, 8
          %s192 = scalar_lea.vmem %s2, %s191
        $region28: #{tpu_custom_call.1} parent=15 // pred_fallthru
          _
      $region16: #{tpu_custom_call.1} parent=5 // pred_fallthru
        _
      %p193 = scmp.le.s32.totalorder 1, %s15
      %p194 = scmp.lt.s32.totalorder %s15, 5
      %p195 = pnand %p193, %p194
      %p196 = pneg %p195
      // Predicated region
      $region29: #{tpu_custom_call.1} parent=5 // pred_check
        _
      $region30: #{tpu_custom_call.1} parent=5 // pred_check_branch
        %198 = sbr.rel (%p195) target = $region32
      $region31: #{tpu_custom_call.1} parent=5 // pred_region
        %s199 = ssub.s32 %s15, 1
        %s200 = sand.u32 %s42, 1
        %s201 = scalar_lea.sflag [#allocation3], %s200
        %s202 = sand.u32 %s42, 1
        %s203 = smul.addr %s202, 128
        %s204 = scalar_lea.vmem [#allocation2], %s203
        // Predicated region
        $region33: #{tpu_custom_call.1} parent=31 // pred_check
          %p205 = pneg %p55
        $region34: #{tpu_custom_call.1} parent=31 // pred_check_branch
          %207 = sbr.rel (%p205) target = $region36
        $region35: #{tpu_custom_call.1} parent=31 // pred_region
          %208 = dma.done %s201, 2048
        $region36: #{tpu_custom_call.1} parent=31 // pred_fallthru
          _
        %s209 = sand.u32 %s42, 1
        %s210 = scalar_lea.sflag [#allocation3], %s209
        %s211 = sand.u32 %s42, 1
        %s212 = smul.addr %s211, 128
        %s213 = scalar_lea.vmem [#allocation2], %s212
        %p214 = pneg %p55
        %p215 = pneg %p52
        %p216 = scmp.lt.s32.totalorder %s24, 1
        %s217 = scalar_select %p216, %s24, 1
        %s218 = smul.addr %s217, 5
        %s219 = smul.addr %s218, 4
        %s220 = scalar_lea.vmem %s1, %s219
        %p221 = pneg %p81
        %p222 = pneg %p78
        %p223 = scmp.lt.s32.totalorder %s24, 1
        %s224 = scalar_select %p223, %s24, 1
        %s225 = smul.addr %s224, 5
        %s226 = smul.addr %s225, 8
        %s227 = scalar_lea.vmem %s2, %s226
        %p228 = pneg %p107
        %p229 = pneg %p104
        %p230 = pneg %p135
        %p231 = pneg %p132
        %s232 = sand.u32 %s122, 1
        %s233 = scalar_lea.sflag [#allocation4], %s232
        %s234 = sand.u32 %s122, 1
        %s235 = smul.addr %s234, 128
        %s236 = scalar_lea.vmem [#allocation5], %s235
        %s237 = smul.u32 4, %s25
        %p238 = scmp.lt.s32.totalorder %s24, 1
        %s239 = scalar_select %p238, %s24, 1
        %s240 = smul.addr %s239, 5
        %s241 = smul.addr %s240, 4
        %s242 = scalar_lea.vmem %s1, %s241
        %p243 = scmp.lt.s32.totalorder %s24, 1
        %s244 = scalar_select %p243, %s24, 1
        %s245 = smul.addr %s244, 5
        %s246 = smul.addr %s245, 8
        %s247 = scalar_lea.vmem %s2, %s246
        %s248 = smul.u32 4, %s25
        %v250 = vld [vmem:[%s204] sm:$0xff]
        %v251 = vld [vmem:[%s204 + $0x8] sm:$0xff]
        %v252 = vld [vmem:[%s204 + $0x10] sm:$0xff]
        %v253 = vld [vmem:[%s204 + $0x18] sm:$0xff]
        %v254 = vld [vmem:[%s204 + $0x20] sm:$0xff]
        %v255 = vld [vmem:[%s204 + $0x28] sm:$0xff]
        %v256 = vld [vmem:[%s204 + $0x30] sm:$0xff]
        %v257 = vld [vmem:[%s204 + $0x38] sm:$0xff]
        %v258 = vld [vmem:[%s204 + $0x40] sm:$0xff]
        %v259 = vld [vmem:[%s204 + $0x48] sm:$0xff]
        %v260 = vld [vmem:[%s204 + $0x50] sm:$0xff]
        %v261 = vld [vmem:[%s204 + $0x58] sm:$0xff]
        %v262 = vld [vmem:[%s204 + $0x60] sm:$0xff]
        %v263 = vld [vmem:[%s204 + $0x68] sm:$0xff]
        %v264 = vld [vmem:[%s204 + $0x70] sm:$0xff]
        %v265 = vld [vmem:[%s204 + $0x78] sm:$0xff]
        %v266 = vpack.c.bf16 %v254, %v250
        %v267 = vpack.c.bf16 %v255, %v251
        %v268 = vpack.c.bf16 %v256, %v252
        %v269 = vpack.c.bf16 %v257, %v253
        %v270 = vpack.c.bf16 %v262, %v258
        %v271 = vpack.c.bf16 %v263, %v259
        %v272 = vpack.c.bf16 %v264, %v260
        %v273 = vpack.c.bf16 %v265, %v261
        %v274 = vld [vmem:[%s242] sm:$0xf]
        %v275 = vld [vmem:[%s242 + $0x4] sm:$0xf]
        %v276 = vld [vmem:[%s242 + $0x8] sm:$0xf]
        %v277 = vld [vmem:[%s242 + $0xc] sm:$0xf]
        %v278 = vld [vmem:[%s242 + $0x10] sm:$0x1]
        %v279 = vld [vmem:[%s247] sm:$0xff]
        %v280 = vld [vmem:[%s247 + $0x8] sm:$0xff]
        %v281 = vld [vmem:[%s247 + $0x10] sm:$0xff]
        %v282 = vld [vmem:[%s247 + $0x18] sm:$0xff]
        %v283 = vld [vmem:[%s247 + $0x20] sm:$0x1]
        %285 = vset.pattern.permute.xlu0 0
        %286 = vperm.xlu0 %285, %v279
        %v287 = vpop.permute.xlu0 %286
        %290 = vset.pattern.permute.xlu0 0
        %291 = vperm.xlu0 %290, %v280
        %v292 = vpop.permute.xlu0 %291
        %295 = vset.pattern.permute.xlu0 0
        %296 = vperm.xlu0 %295, %v281
        %v297 = vpop.permute.xlu0 %296
        %300 = vset.pattern.permute.xlu0 0
        %301 = vperm.xlu0 %300, %v282
        %v302 = vpop.permute.xlu0 %301
        %305 = vset.pattern.permute.xlu0 0
        %306 = vperm.xlu0 %305, %v283
        %v307 = vpop.permute.xlu0 %306
        %v314 = vunpack.c.l.b16 %v274
        %v315 = vunpack.c.l.b16 %v275
        %v316 = vunpack.c.l.b16 %v276
        %v317 = vunpack.c.l.b16 %v277
        %v318 = vunpack.c.l.b16 %v278
        %v319 = vpack.c.b16 %v315, %v314
        %v320 = vpack.c.b16 %v317, %v316
        %v321 = vpack.c.b16 %v318, %v318
        %vm322 = vcmask 261120
        %v324 = vsel %vm322, %v319, 0
        %v327 = vsel %vm322, %v320, 0
        %v330 = vsel %vm322, %v321, 0
        %332 = vmatprep.subr.bf16.mxu0 %v267
        %333 = vmatpush1.bf16.msra.mxu0 %v266
        %334 = vmatprep.subr.bf16.mxu0 %v271
        %335 = vmatpush1.bf16.msra.mxu0 %v270
        %336 = vmatprep.subr.bf16.mxu0 0
        %337 = vmatpush1.bf16.msra.mxu0 0
        %338 = vmatprep.subr.bf16.mxu0 0
        %339 = vmatpush1.bf16.msra.mxu0 0
        %340 = vmatprep.subr.bf16.mxu0 0
        %341 = vmatpush1.bf16.msra.mxu0 0
        %342 = vmatprep.subr.bf16.mxu0 0
        %343 = vmatpush1.bf16.msra.mxu0 0
        %344 = vmatprep.subr.bf16.mxu0 0
        %345 = vmatpush1.bf16.msra.mxu0 0
        %346 = vmatprep.subr.bf16.mxu0 0
        %347 = vmatpush1.bf16.msra.mxu0 0
        %348 = vmatprep.subr.bf16.mxu0 0
        %349 = vmatpush1.bf16.msra.mxu0 0
        %350 = vmatprep.subr.bf16.mxu0 0
        %351 = vmatpush1.bf16.msra.mxu0 0
        %352 = vmatprep.subr.bf16.mxu0 0
        %353 = vmatpush1.bf16.msra.mxu0 0
        %354 = vmatprep.subr.bf16.mxu0 0
        %355 = vmatpush1.bf16.msra.mxu0 0
        %356 = vmatprep.subr.bf16.mxu0 0
        %357 = vmatpush1.bf16.msra.mxu0 0
        %358 = vmatprep.subr.bf16.mxu0 0
        %359 = vmatpush1.bf16.msra.mxu0 0
        %360 = vmatprep.subr.bf16.mxu0 0
        %361 = vmatpush1.bf16.msra.mxu0 0
        %362 = vmatprep.subr.bf16.mxu0 0
        %363 = vmatpush1.bf16.msra.mxu0 0
        %364 = vmatprep.mubr.bf16.mxu0 0
        %365 = vmatmul.mubr.bf16.gmra.mrb[0].mxu0 %v324
        %v366 = vpop.f32.mrb[0].mxu0
        %v367 = vadd.f32 %v287, %v366
        %v368 = vpop.f32.mrb[0].mxu0
        %v369 = vadd.f32 %v287, %v368
        %v370 = vpop.f32.mrb[0].mxu0
        %v371 = vadd.f32 %v292, %v370
        %v372 = vpop.f32.mrb[0].mxu0
        %v373 = vadd.f32 %v292, %v372
        %374 = vmatprep.mubr.bf16.mxu0 0
        %375 = vmatmul.mubr.bf16.gmra.mrb[0].mxu0 %v327
        %v376 = vpop.f32.mrb[0].mxu0
        %v377 = vadd.f32 %v297, %v376
        %v378 = vpop.f32.mrb[0].mxu0
        %v379 = vadd.f32 %v297, %v378
        %v380 = vpop.f32.mrb[0].mxu0
        %v381 = vadd.f32 %v302, %v380
        %v382 = vpop.f32.mrb[0].mxu0
        %v383 = vadd.f32 %v302, %v382
        %384 = vmatprep.mubr.bf16.mxu0 0
        %385 = vmatmul.mubr.bf16.gmra.mrb[0].mxu0 %v330
        %v386 = vpop.f32.mrb[0].mxu0
        %v387 = vadd.f32 %v307, %v386
        %v388 = vpop.f32.mrb[0].mxu0
        %v389 = vadd.f32 %v307, %v388
        %v390 = vpop.f32.mrb[0].mxu0
        %v391 = vpop.f32.mrb[0].mxu0
        %392 = vdwg.mxu0
        %393 = vmatprep.subr.bf16.mxu0 %v269
        %394 = vmatpush1.bf16.msra.mxu0 %v268
        %395 = vmatprep.subr.bf16.mxu0 %v273
        %396 = vmatpush1.bf16.msra.mxu0 %v272
        %397 = vmatprep.subr.bf16.mxu0 0
        %398 = vmatpush1.bf16.msra.mxu0 0
        %399 = vmatprep.subr.bf16.mxu0 0
        %400 = vmatpush1.bf16.msra.mxu0 0
        %401 = vmatprep.subr.bf16.mxu0 0
        %402 = vmatpush1.bf16.msra.mxu0 0
        %403 = vmatprep.subr.bf16.mxu0 0
        %404 = vmatpush1.bf16.msra.mxu0 0
        %405 = vmatprep.subr.bf16.mxu0 0
        %406 = vmatpush1.bf16.msra.mxu0 0
        %407 = vmatprep.subr.bf16.mxu0 0
        %408 = vmatpush1.bf16.msra.mxu0 0
        %409 = vmatprep.subr.bf16.mxu0 0
        %410 = vmatpush1.bf16.msra.mxu0 0
        %411 = vmatprep.subr.bf16.mxu0 0
        %412 = vmatpush1.bf16.msra.mxu0 0
        %413 = vmatprep.subr.bf16.mxu0 0
        %414 = vmatpush1.bf16.msra.mxu0 0
        %415 = vmatprep.subr.bf16.mxu0 0
        %416 = vmatpush1.bf16.msra.mxu0 0
        %417 = vmatprep.subr.bf16.mxu0 0
        %418 = vmatpush1.bf16.msra.mxu0 0
        %419 = vmatprep.subr.bf16.mxu0 0
        %420 = vmatpush1.bf16.msra.mxu0 0
        %421 = vmatprep.subr.bf16.mxu0 0
        %422 = vmatpush1.bf16.msra.mxu0 0
        %423 = vmatprep.subr.bf16.mxu0 0
        %424 = vmatpush1.bf16.msra.mxu0 0
        %425 = vmatprep.mubr.bf16.mxu0 0
        %426 = vmatmul.mubr.bf16.gmra.mrb[0].mxu0 %v324
        %v427 = vpop.f32.mrb[0].mxu0
        %v428 = vadd.f32 %v287, %v427
        %v429 = vpop.f32.mrb[0].mxu0
        %v430 = vadd.f32 %v287, %v429
        %v431 = vpop.f32.mrb[0].mxu0
        %v432 = vadd.f32 %v292, %v431
        %v433 = vpop.f32.mrb[0].mxu0
        %v434 = vadd.f32 %v292, %v433
        %435 = vmatprep.mubr.bf16.mxu0 0
        %436 = vmatmul.mubr.bf16.gmra.mrb[0].mxu0 %v327
        %v437 = vpop.f32.mrb[0].mxu0
        %v438 = vadd.f32 %v297, %v437
        %v439 = vpop.f32.mrb[0].mxu0
        %v440 = vadd.f32 %v297, %v439
        %v441 = vpop.f32.mrb[0].mxu0
        %v442 = vadd.f32 %v302, %v441
        %v443 = vpop.f32.mrb[0].mxu0
        %v444 = vadd.f32 %v302, %v443
        %445 = vmatprep.mubr.bf16.mxu0 0
        %446 = vmatmul.mubr.bf16.gmra.mrb[0].mxu0 %v330
        %v447 = vpop.f32.mrb[0].mxu0
        %v448 = vadd.f32 %v307, %v447
        %v449 = vpop.f32.mrb[0].mxu0
        %v450 = vadd.f32 %v307, %v449
        %v451 = vpop.f32.mrb[0].mxu0
        %v452 = vpop.f32.mrb[0].mxu0
        %453 = vdwg.mxu0
        %v454 = vxor.u32 %v387, 2147483648
        %v455 = vxor.u32 %v389, 2147483648
        %v456 = vxor.u32 %v448, 2147483648
        %v457 = vxor.u32 %v450, 2147483648
        %v458 = vmul.f32 %v454, 1.442695
        %v459 = vpow.pop %v458
        %v460 = vmul.f32 %v455, 1.442695
        %v461 = vpow.pop %v460
        %v462 = vmul.f32 %v456, 1.442695
        %v463 = vpow.pop %v462
        %v464 = vmul.f32 %v457, 1.442695
        %v465 = vpow.pop %v464
        %v466 = vadd.f32 %v459, 1.0
        %v467 = vadd.f32 %v461, 1.0
        %v468 = vadd.f32 %v463, 1.0
        %v469 = vadd.f32 %v465, 1.0
        %v470 = vrcp.pop %v466
        %v471 = vmul.f32 1.0, %v470
        %v472 = vrcp.pop %v467
        %v473 = vmul.f32 1.0, %v472
        %v474 = vrcp.pop %v468
        %v475 = vmul.f32 1.0, %v474
        %v476 = vrcp.pop %v469
        %v477 = vmul.f32 1.0, %v476
        %v478 = vlaneseq
        %v479 = vshrl.u32 %v478, 7
        %v480 = vsub.s32 0, %v479
        %v481 = vrot.slane %v471, %v480
        %v482 = vlaneseq
        %v483 = vshrl.u32 %v482, 7
        %v484 = vsub.s32 0, %v483
        %v485 = vrot.slane %v473, %v484
        %v486 = vlaneseq
        %v487 = vshrl.u32 %v486, 7
        %v488 = vsub.s32 0, %v487
        %v489 = vrot.slane %v475, %v488
        %v490 = vlaneseq
        %v491 = vshrl.u32 %v490, 7
        %v492 = vsub.s32 0, %v491
        %v493 = vrot.slane %v477, %v492
        %v494 = vmul.f32 %v367, %v481
        %v495 = vmul.f32 %v369, %v485
        %v496 = vmul.f32 %v428, %v489
        %v497 = vmul.f32 %v430, %v493
        %v498 = vmul.f32 %v371, %v481
        %v499 = vmul.f32 %v373, %v485
        %v500 = vmul.f32 %v432, %v489
        %v501 = vmul.f32 %v434, %v493
        %v502 = vmul.f32 %v377, %v481
        %v503 = vmul.f32 %v379, %v485
        %v504 = vmul.f32 %v438, %v489
        %v505 = vmul.f32 %v440, %v493
        %v506 = vmul.f32 %v381, %v481
        %v507 = vmul.f32 %v383, %v485
        %v508 = vmul.f32 %v442, %v489
        %v509 = vmul.f32 %v444, %v493
        %510 = vst [vmem:[%s236] sm:$0xff] %v494
        %511 = vst [vmem:[%s236 + $0x8] sm:$0xff] %v495
        %512 = vst [vmem:[%s236 + $0x10] sm:$0xff] %v496
        %513 = vst [vmem:[%s236 + $0x18] sm:$0xff] %v497
        %514 = vst [vmem:[%s236 + $0x20] sm:$0xff] %v498
        %515 = vst [vmem:[%s236 + $0x28] sm:$0xff] %v499
        %516 = vst [vmem:[%s236 + $0x30] sm:$0xff] %v500
        %517 = vst [vmem:[%s236 + $0x38] sm:$0xff] %v501
        %518 = vst [vmem:[%s236 + $0x40] sm:$0xff] %v502
        %519 = vst [vmem:[%s236 + $0x48] sm:$0xff] %v503
        %520 = vst [vmem:[%s236 + $0x50] sm:$0xff] %v504
        %521 = vst [vmem:[%s236 + $0x58] sm:$0xff] %v505
        %522 = vst [vmem:[%s236 + $0x60] sm:$0xff] %v506
        %523 = vst [vmem:[%s236 + $0x68] sm:$0xff] %v507
        %524 = vst [vmem:[%s236 + $0x70] sm:$0xff] %v508
        %525 = vst [vmem:[%s236 + $0x78] sm:$0xff] %v509
        %s526 = sand.u32 %s122, 1
        %s527 = scalar_lea.sflag [#allocation4], %s526
        %s528 = sand.u32 %s122, 1
        %s529 = smul.addr %s528, 128
        %s530 = scalar_lea.vmem [#allocation5], %s529
        // Predicated region
        $region37: #{tpu_custom_call.1} parent=31 // pred_check
          %p531 = pneg %p132
        $region38: #{tpu_custom_call.1} parent=31 // pred_check_branch
          %533 = sbr.rel (%p531) target = $region40
        $region39: #{tpu_custom_call.1} parent=31 // pred_region
          %s534 = smul.u32 4, %s25
          %s536 = ssub.s32 2048, 2048
          %537 = vsyncadd %s527, %s536
          %s538 = smul.addr %s24, 32
          %s539 = sadd.s32 %s534, %s538
          %s540 = smul.addr %s539, 128
          %s541 = scalar_lea.hbm %s3, %s540
          %s542 = sshll.u32 %s530, 4
          %s543 = int_to_ptr.vmem [resolvable:$true] %s542
          %548 = dma.vmem_to_hbm [thread:$0]  %s543, 2048, %s541, %s527, 512, 1024, 32
        $region40: #{tpu_custom_call.1} parent=31 // pred_fallthru
          _
      $region32: #{tpu_custom_call.1} parent=5 // pred_fallthru
        _
      %p549 = scmp.le.s32.totalorder 2, %s15
      // Predicated region
      $region41: #{tpu_custom_call.1} parent=5 // pred_check
        %p550 = pneg %p549
      $region42: #{tpu_custom_call.1} parent=5 // pred_check_branch
        %552 = sbr.rel (%p550) target = $region44
      $region43: #{tpu_custom_call.1} parent=5 // pred_region
        %s553 = ssub.s32 %s15, 2
        // Predicated region
        $region45: #{tpu_custom_call.1} parent=43 // pred_check
          %p554 = pneg %p138
        $region46: #{tpu_custom_call.1} parent=43 // pred_check_branch
          %556 = sbr.rel (%p554) target = $region48
        $region47: #{tpu_custom_call.1} parent=43 // pred_region
          %s557 = sand.u32 %s123, 1
          %s558 = scalar_lea.sflag [#allocation4], %s557
          %s559 = sand.u32 %s123, 1
          %s560 = smul.addr %s559, 128
          %s561 = scalar_lea.vmem [#allocation5], %s560
          %562 = dma.done %s558, 2048
        $region48: #{tpu_custom_call.1} parent=43 // pred_fallthru
          _
      $region44: #{tpu_custom_call.1} parent=5 // pred_fallthru
        _
    $region6: #{tpu_custom_call.1} parent=1 // loop_footer
      %s19 = sadd.s32 1, %s15
    $region7: #{tpu_custom_call.1} parent=1 // loop_footer_branch
      %14 = sbr.rel target = $region3
    $region8: #{tpu_custom_call.1} parent=1 // loop_exit
      _
    %563 = vsyncpa [#allocation3], 1
    %s564 = scalar_lea.sflag [#allocation3], 1
    %565 = vsyncpa %s564, 1
    %566 = vsyncpa [#allocation4], 1
    %s567 = scalar_lea.sflag [#allocation4], 1
    %568 = vsyncpa %s567, 1

</llo_original>
